<compile_context>
chip_gen: v6e
topology: v6e:2x2x1
jax: 0.10.0
libtpu: 0.0.40
codegen_flags: <defaults>
</compile_context>

<pallas_src>
import functools

import jax
import jax.numpy as jnp
from jax.experimental import pallas as pl
from jax.experimental.pallas import tpu as pltpu


def _round_up(n, m):
    return ((n + m - 1) // m) * m


# ---------------------------------------------------------------------------
# Fused kernel: ReLU + GRU over S steps + Linear head + log_softmax.
# Everything is tiny and fully VMEM-resident (no grid, no pipelining).
# ---------------------------------------------------------------------------
def decoder_kernel(x_ref, h0_ref, wih_ref, whh_ref, b_rzn_ref, b_hn_ref,
                   w_out_ref, b_out_ref, logp_ref, hfin_ref, *, seq_len, batch):
    f32 = jnp.float32
    bf16 = jnp.bfloat16
    hp = h0_ref.shape[-1]          # padded gate width (multiple of 128)

    # Hoisted input-side work: ReLU over the whole sequence, then ONE fused
    # (S*Bp, Hp) x (Hp, 3Hp) gate matmul with the r/z biases (b_ih+b_hh) and the
    # n-gate input bias (b_in) folded in.
    x = jnp.maximum(x_ref[...], 0.0)
    gi = (jnp.dot(x.astype(bf16), wih_ref[...], preferred_element_type=f32)
          + b_rzn_ref[...])                                  # (S*Bp, 3Hp), f32

    # Loop-invariant loads / broadcasts hoisted out of the time loop.
    whh = whh_ref[...]                                       # (Hp, 3Hp), bf16
    b_hn = jnp.broadcast_to(b_hn_ref[...], (batch, hp))      # (Bp, Hp), f32

    def step(h, t):
        # Static, sublane-aligned row slice of the precomputed input gates.
        gi_t = gi[t * batch:(t + 1) * batch, :]
        # ONE fused recurrent dot per step; per-gate slices are lane-aligned
        # full-vreg slices at offsets 0 / Hp / 2Hp.
        gh = jnp.dot(h.astype(bf16), whh, preferred_element_type=f32)
        r = jax.nn.sigmoid(gi_t[:, :hp] + gh[:, :hp])
        z = jax.nn.sigmoid(gi_t[:, hp:2 * hp] + gh[:, hp:2 * hp])
        n = jnp.tanh(gi_t[:, 2 * hp:] + r * (gh[:, 2 * hp:] + b_hn))
        return (1.0 - z) * n + z * h

    h = h0_ref[0].astype(f32)
    h = step(h, 0)
    h1 = h                          # GRU output at t = 0 (== out_seq[0]) feeds the head.
    for t in range(1, seq_len):     # fully unrolled serial recurrence; seq_len is static.
        h = step(h, t)

    hfin_ref[0] = h.astype(hfin_ref.dtype)

    # Fused head: Linear(Hp -> Vp) + log_softmax.  Padded vocab lanes carry a
    # -1e30 bias so they contribute nothing to max / LSE.
    logits = (jnp.dot(h1.astype(bf16), w_out_ref[...], preferred_element_type=f32)
              + b_out_ref[...])
    m = jnp.max(logits, axis=1, keepdims=True)
    s = logits - m
    lse = jnp.log(jnp.sum(jnp.exp(s), axis=1, keepdims=True))
    logp_ref[...] = (s - lse).astype(logp_ref.dtype)


# ---------------------------------------------------------------------------
# One-time weight prep (NOT jitted / not in the forward path): per-gate split,
# transpose, lane padding to Hp, bias folding, bf16 cast, vocab padding to Vp.
# ---------------------------------------------------------------------------
def prepare_params(params, *, neg_fill=-1e30):
    H = params["w_hh"].shape[1]
    V = params["w_out"].shape[0]
    Hp = _round_up(H, 128)
    Vp = _round_up(V, 128)
    w_ih, w_hh = params["w_ih"], params["w_hh"]
    b_ih, b_hh = params["b_ih"], params["b_hh"]

    def fuse_gates(w):  # (3H, H) -> (Hp, 3Hp): per-gate transpose, zero-padded
        out = jnp.zeros((Hp, 3 * Hp), jnp.float32)
        for g in range(3):
            out = out.at[:H, g * Hp:g * Hp + H].set(w[g * H:(g + 1) * H, :].T)
        return out

    b_rzn = jnp.zeros((1, 3 * Hp), jnp.float32)
    b_rzn = b_rzn.at[0, 0:H].set(b_ih[0:H] + b_hh[0:H])                 # r: b_ir + b_hr
    b_rzn = b_rzn.at[0, Hp:Hp + H].set(b_ih[H:2 * H] + b_hh[H:2 * H])   # z: b_iz + b_hz
    b_rzn = b_rzn.at[0, 2 * Hp:2 * Hp + H].set(b_ih[2 * H:3 * H])       # n: b_in only
    b_hn = jnp.zeros((1, Hp), jnp.float32).at[0, :H].set(b_hh[2 * H:3 * H])

    w_out = (jnp.zeros((Hp, Vp), jnp.float32)
             .at[:H, :V].set(params["w_out"].T).astype(jnp.bfloat16))
    b_out = jnp.full((1, Vp), neg_fill, jnp.float32).at[0, :V].set(params["b_out"])

    return dict(
        wih=fuse_gates(w_ih).astype(jnp.bfloat16),
        whh=fuse_gates(w_hh).astype(jnp.bfloat16),
        b_rzn=b_rzn, b_hn=b_hn, w_out=w_out, b_out=b_out,
    )


# ---------------------------------------------------------------------------
# Jitted forward: pad activations, single pallas_call, slice off padding.
# ---------------------------------------------------------------------------
@functools.partial(jax.jit, static_argnames=("hidden_size", "output_size"))
def decoder_rnn_forward(x, h0, prepped, *, hidden_size, output_size):
    S, B, H = x.shape
    Hp = prepped["whh"].shape[0]
    Vp = prepped["w_out"].shape[1]
    Bp = _round_up(B, 8)

    # Pad lanes to 128 / sublanes to 8 and flatten (S,B)->rows OUTSIDE the kernel
    # so every in-kernel slice is static and aligned and no in-kernel reshape occurs.
    x_p = jnp.pad(x.astype(jnp.float32),
                  ((0, 0), (0, Bp - B), (0, Hp - H))).reshape(S * Bp, Hp)
    h0_p = jnp.pad(h0.astype(jnp.float32), ((0, 0), (0, Bp - B), (0, Hp - H)))

    vmem = pl.BlockSpec(memory_space=pltpu.MemorySpace.VMEM)
    kernel = functools.partial(decoder_kernel, seq_len=S, batch=Bp)
    logp_p, hfin_p = pl.pallas_call(
        kernel,
        out_shape=(
            jax.ShapeDtypeStruct((Bp, Vp), jnp.float32),
            jax.ShapeDtypeStruct((1, Bp, Hp), jnp.float32),
        ),
        in_specs=[vmem] * 8,
        out_specs=(vmem, vmem),
    )(x_p, h0_p, prepped["wih"], prepped["whh"], prepped["b_rzn"],
      prepped["b_hn"], prepped["w_out"], prepped["b_out"])

    log_probs = logp_p[:B, :output_size].astype(x.dtype)
    h_fin = hfin_p[:, :B, :hidden_size].astype(x.dtype)
    return log_probs, h_fin


# ---------------------------------------------------------------------------
# Pure-JAX f32 reference (PyTorch GRU conventions) for validation.
# ---------------------------------------------------------------------------
def reference_forward(x, h0, p):
    H = h0.shape[-1]
    x = jnp.maximum(x, 0.0)
    h = h0[0]
    outs = []
    for t in range(x.shape[0]):
        gi = x[t] @ p["w_ih"].T + p["b_ih"]
        gh = h @ p["w_hh"].T + p["b_hh"]
        r = jax.nn.sigmoid(gi[:, :H] + gh[:, :H])
        z = jax.nn.sigmoid(gi[:, H:2 * H] + gh[:, H:2 * H])
        n = jnp.tanh(gi[:, 2 * H:] + r * gh[:, 2 * H:])
        h = (1.0 - z) * n + z * h
        outs.append(h)
    logits = outs[0] @ p["w_out"].T + p["b_out"]
    return jax.nn.log_softmax(logits, axis=1), h[None]


if __name__ == "__main__":
    S, B, H, V = 3, 2, 32, 48  # seq, batch, hidden_size, output_size (vocab)

    key = jax.random.PRNGKey(0)
    ks = jax.random.split(key, 8)
    bound = 1.0 / (H ** 0.5)
    u = lambda k, shp: jax.random.uniform(k, shp, jnp.float32, -bound, bound)

    params = {
        "w_ih": u(ks[0], (3 * H, H)),
        "w_hh": u(ks[1], (3 * H, H)),
        "b_ih": u(ks[2], (3 * H,)),
        "b_hh": u(ks[3], (3 * H,)),
        "w_out": u(ks[4], (V, H)),
        "b_out": u(ks[5], (V,)),
    }
    x = jax.random.normal(ks[6], (S, B, H), jnp.float32)
    h0 = jax.random.normal(ks[7], (1, B, H), jnp.float32)

    prepped = prepare_params(params)          # one-time, outside the forward jit
    jax.block_until_ready(prepped)

    log_probs, h_fin = decoder_rnn_forward(x, h0, prepped,
                                           hidden_size=H, output_size=V)
    jax.block_until_ready((log_probs, h_fin))

    ref_lp, ref_h = reference_forward(x, h0, params)
    # bf16 matmul weights (f32 accumulation) -> relaxed tolerance vs. the f32 reference.
    assert log_probs.shape == (B, V) and h_fin.shape == (1, B, H)
    assert jnp.allclose(log_probs, ref_lp, atol=2e-2, rtol=2e-2), "log_probs mismatch"
    assert jnp.allclose(h_fin, ref_h, atol=2e-2, rtol=2e-2), "hidden mismatch"

    print("KERNEL_OK")
</pallas_src>

<mosaic_0001>
module attributes {stable_mosaic.version = 11 : i64} {
  func.func @decoder_kernel(%arg0: memref<24x128xf32, #tpu.memory_space<vmem>>, %arg1: memref<1x8x128xf32, #tpu.memory_space<vmem>>, %arg2: memref<128x384xbf16, #tpu.memory_space<vmem>>, %arg3: memref<128x384xbf16, #tpu.memory_space<vmem>>, %arg4: memref<1x384xf32, #tpu.memory_space<vmem>>, %arg5: memref<1x128xf32, #tpu.memory_space<vmem>>, %arg6: memref<128x128xbf16, #tpu.memory_space<vmem>>, %arg7: memref<1x128xf32, #tpu.memory_space<vmem>>, %arg8: memref<8x128xf32, #tpu.memory_space<vmem>>, %arg9: memref<1x8x128xf32, #tpu.memory_space<vmem>>) attributes {dimension_semantics = [], scalar_prefetch = 0 : i64, scratch_operands = 0 : i64, tpu.core_type = #tpu.core_type<tc>} {
    %c0 = arith.constant 0 : index
    %c0_0 = arith.constant 0 : index
    %0 = vector.load %arg0[%c0, %c0_0] : memref<24x128xf32, #tpu.memory_space<vmem>>, vector<24x128xf32>
    %cst = arith.constant 0.000000e+00 : f32
    %1 = vector.broadcast %cst : f32 to vector<24x128xf32>
    %2 = arith.maximumf %0, %1 : vector<24x128xf32>
    %3 = arith.truncf %2 : vector<24x128xf32> to vector<24x128xbf16>
    %c0_1 = arith.constant 0 : index
    %c0_2 = arith.constant 0 : index
    %4 = vector.load %arg2[%c0_1, %c0_2] : memref<128x384xbf16, #tpu.memory_space<vmem>>, vector<128x384xbf16>
    %cst_3 = arith.constant dense<0.000000e+00> : vector<24x384xf32>
    %5 = tpu.matmul %3, %4, %cst_3 {dimension_numbers = #tpu.dot_dimension_numbers<[1], [0], [0], [1], [0, 0, 1, 1], [], []>} : vector<24x128xbf16>, vector<128x384xbf16>, vector<24x384xf32> -> vector<24x384xf32>
    %c0_4 = arith.constant 0 : index
    %c0_5 = arith.constant 0 : index
    %6 = vector.load %arg4[%c0_4, %c0_5] : memref<1x384xf32, #tpu.memory_space<vmem>>, vector<1x384xf32>
    %7 = vector.broadcast %6 : vector<1x384xf32> to vector<24x384xf32>
    %8 = arith.addf %5, %7 : vector<24x384xf32>
    %c0_6 = arith.constant 0 : index
    %c0_7 = arith.constant 0 : index
    %9 = vector.load %arg3[%c0_6, %c0_7] : memref<128x384xbf16, #tpu.memory_space<vmem>>, vector<128x384xbf16>
    %c0_8 = arith.constant 0 : index
    %c0_9 = arith.constant 0 : index
    %10 = vector.load %arg5[%c0_8, %c0_9] : memref<1x128xf32, #tpu.memory_space<vmem>>, vector<1x128xf32>
    %11 = vector.shape_cast %10 : vector<1x128xf32> to vector<1x128xf32>
    %12 = vector.broadcast %11 : vector<1x128xf32> to vector<8x128xf32>
    %c0_10 = arith.constant 0 : index
    %c0_11 = arith.constant 0 : index
    %c0_12 = arith.constant 0 : index
    %13 = vector.load %arg1[%c0_10, %c0_11, %c0_12] : memref<1x8x128xf32, #tpu.memory_space<vmem>>, vector<1x8x128xf32>
    %14 = vector.shape_cast %13 : vector<1x8x128xf32> to vector<8x128xf32>
    %15 = vector.extract_strided_slice %8 {offsets = [0, 0], sizes = [8, 384], strides = [1, 1]} : vector<24x384xf32> to vector<8x384xf32>
    %16 = arith.truncf %14 : vector<8x128xf32> to vector<8x128xbf16>
    %cst_13 = arith.constant dense<0.000000e+00> : vector<8x384xf32>
    %17 = tpu.matmul %16, %9, %cst_13 {dimension_numbers = #tpu.dot_dimension_numbers<[1], [0], [0], [1], [0, 0, 1, 1], [], []>} : vector<8x128xbf16>, vector<128x384xbf16>, vector<8x384xf32> -> vector<8x384xf32>
    %18 = vector.extract_strided_slice %15 {offsets = [0, 0], sizes = [8, 128], strides = [1, 1]} : vector<8x384xf32> to vector<8x128xf32>
    %19 = vector.extract_strided_slice %17 {offsets = [0, 0], sizes = [8, 128], strides = [1, 1]} : vector<8x384xf32> to vector<8x128xf32>
    %20 = arith.addf %18, %19 : vector<8x128xf32>
    %21 = arith.negf %20 : vector<8x128xf32>
    %22 = math.exp %21 : vector<8x128xf32>
    %cst_14 = arith.constant 1.000000e+00 : f32
    %23 = vector.broadcast %cst_14 : f32 to vector<8x128xf32>
    %24 = arith.addf %23, %22 : vector<8x128xf32>
    %25 = arith.divf %23, %24 : vector<8x128xf32>
    %26 = vector.extract_strided_slice %15 {offsets = [0, 128], sizes = [8, 128], strides = [1, 1]} : vector<8x384xf32> to vector<8x128xf32>
    %27 = vector.extract_strided_slice %17 {offsets = [0, 128], sizes = [8, 128], strides = [1, 1]} : vector<8x384xf32> to vector<8x128xf32>
    %28 = arith.addf %26, %27 : vector<8x128xf32>
    %29 = arith.negf %28 : vector<8x128xf32>
    %30 = math.exp %29 : vector<8x128xf32>
    %cst_15 = arith.constant 1.000000e+00 : f32
    %31 = vector.broadcast %cst_15 : f32 to vector<8x128xf32>
    %32 = arith.addf %31, %30 : vector<8x128xf32>
    %33 = arith.divf %31, %32 : vector<8x128xf32>
    %34 = vector.extract_strided_slice %15 {offsets = [0, 256], sizes = [8, 128], strides = [1, 1]} : vector<8x384xf32> to vector<8x128xf32>
    %35 = vector.extract_strided_slice %17 {offsets = [0, 256], sizes = [8, 128], strides = [1, 1]} : vector<8x384xf32> to vector<8x128xf32>
    %36 = arith.addf %35, %12 : vector<8x128xf32>
    %37 = arith.mulf %25, %36 : vector<8x128xf32>
    %38 = arith.addf %34, %37 : vector<8x128xf32>
    %39 = math.tanh %38 : vector<8x128xf32>
    %cst_16 = arith.constant 1.000000e+00 : f32
    %40 = vector.broadcast %cst_16 : f32 to vector<8x128xf32>
    %41 = arith.subf %40, %33 : vector<8x128xf32>
    %42 = arith.mulf %41, %39 : vector<8x128xf32>
    %43 = arith.mulf %33, %14 : vector<8x128xf32>
    %44 = arith.addf %42, %43 : vector<8x128xf32>
    %45 = vector.extract_strided_slice %8 {offsets = [8, 0], sizes = [8, 384], strides = [1, 1]} : vector<24x384xf32> to vector<8x384xf32>
    %46 = arith.truncf %44 : vector<8x128xf32> to vector<8x128xbf16>
    %cst_17 = arith.constant dense<0.000000e+00> : vector<8x384xf32>
    %47 = tpu.matmul %46, %9, %cst_17 {dimension_numbers = #tpu.dot_dimension_numbers<[1], [0], [0], [1], [0, 0, 1, 1], [], []>} : vector<8x128xbf16>, vector<128x384xbf16>, vector<8x384xf32> -> vector<8x384xf32>
    %48 = vector.extract_strided_slice %45 {offsets = [0, 0], sizes = [8, 128], strides = [1, 1]} : vector<8x384xf32> to vector<8x128xf32>
    %49 = vector.extract_strided_slice %47 {offsets = [0, 0], sizes = [8, 128], strides = [1, 1]} : vector<8x384xf32> to vector<8x128xf32>
    %50 = arith.addf %48, %49 : vector<8x128xf32>
    %51 = arith.negf %50 : vector<8x128xf32>
    %52 = math.exp %51 : vector<8x128xf32>
    %cst_18 = arith.constant 1.000000e+00 : f32
    %53 = vector.broadcast %cst_18 : f32 to vector<8x128xf32>
    %54 = arith.addf %53, %52 : vector<8x128xf32>
    %55 = arith.divf %53, %54 : vector<8x128xf32>
    %56 = vector.extract_strided_slice %45 {offsets = [0, 128], sizes = [8, 128], strides = [1, 1]} : vector<8x384xf32> to vector<8x128xf32>
    %57 = vector.extract_strided_slice %47 {offsets = [0, 128], sizes = [8, 128], strides = [1, 1]} : vector<8x384xf32> to vector<8x128xf32>
    %58 = arith.addf %56, %57 : vector<8x128xf32>
    %59 = arith.negf %58 : vector<8x128xf32>
    %60 = math.exp %59 : vector<8x128xf32>
    %cst_19 = arith.constant 1.000000e+00 : f32
    %61 = vector.broadcast %cst_19 : f32 to vector<8x128xf32>
    %62 = arith.addf %61, %60 : vector<8x128xf32>
    %63 = arith.divf %61, %62 : vector<8x128xf32>
    %64 = vector.extract_strided_slice %45 {offsets = [0, 256], sizes = [8, 128], strides = [1, 1]} : vector<8x384xf32> to vector<8x128xf32>
    %65 = vector.extract_strided_slice %47 {offsets = [0, 256], sizes = [8, 128], strides = [1, 1]} : vector<8x384xf32> to vector<8x128xf32>
    %66 = arith.addf %65, %12 : vector<8x128xf32>
    %67 = arith.mulf %55, %66 : vector<8x128xf32>
    %68 = arith.addf %64, %67 : vector<8x128xf32>
    %69 = math.tanh %68 : vector<8x128xf32>
    %cst_20 = arith.constant 1.000000e+00 : f32
    %70 = vector.broadcast %cst_20 : f32 to vector<8x128xf32>
    %71 = arith.subf %70, %63 : vector<8x128xf32>
    %72 = arith.mulf %71, %69 : vector<8x128xf32>
    %73 = arith.mulf %63, %44 : vector<8x128xf32>
    %74 = arith.addf %72, %73 : vector<8x128xf32>
    %75 = vector.extract_strided_slice %8 {offsets = [16, 0], sizes = [8, 384], strides = [1, 1]} : vector<24x384xf32> to vector<8x384xf32>
    %76 = arith.truncf %74 : vector<8x128xf32> to vector<8x128xbf16>
    %cst_21 = arith.constant dense<0.000000e+00> : vector<8x384xf32>
    %77 = tpu.matmul %76, %9, %cst_21 {dimension_numbers = #tpu.dot_dimension_numbers<[1], [0], [0], [1], [0, 0, 1, 1], [], []>} : vector<8x128xbf16>, vector<128x384xbf16>, vector<8x384xf32> -> vector<8x384xf32>
    %78 = vector.extract_strided_slice %75 {offsets = [0, 0], sizes = [8, 128], strides = [1, 1]} : vector<8x384xf32> to vector<8x128xf32>
    %79 = vector.extract_strided_slice %77 {offsets = [0, 0], sizes = [8, 128], strides = [1, 1]} : vector<8x384xf32> to vector<8x128xf32>
    %80 = arith.addf %78, %79 : vector<8x128xf32>
    %81 = arith.negf %80 : vector<8x128xf32>
    %82 = math.exp %81 : vector<8x128xf32>
    %cst_22 = arith.constant 1.000000e+00 : f32
    %83 = vector.broadcast %cst_22 : f32 to vector<8x128xf32>
    %84 = arith.addf %83, %82 : vector<8x128xf32>
    %85 = arith.divf %83, %84 : vector<8x128xf32>
    %86 = vector.extract_strided_slice %75 {offsets = [0, 128], sizes = [8, 128], strides = [1, 1]} : vector<8x384xf32> to vector<8x128xf32>
    %87 = vector.extract_strided_slice %77 {offsets = [0, 128], sizes = [8, 128], strides = [1, 1]} : vector<8x384xf32> to vector<8x128xf32>
    %88 = arith.addf %86, %87 : vector<8x128xf32>
    %89 = arith.negf %88 : vector<8x128xf32>
    %90 = math.exp %89 : vector<8x128xf32>
    %cst_23 = arith.constant 1.000000e+00 : f32
    %91 = vector.broadcast %cst_23 : f32 to vector<8x128xf32>
    %92 = arith.addf %91, %90 : vector<8x128xf32>
    %93 = arith.divf %91, %92 : vector<8x128xf32>
    %94 = vector.extract_strided_slice %75 {offsets = [0, 256], sizes = [8, 128], strides = [1, 1]} : vector<8x384xf32> to vector<8x128xf32>
    %95 = vector.extract_strided_slice %77 {offsets = [0, 256], sizes = [8, 128], strides = [1, 1]} : vector<8x384xf32> to vector<8x128xf32>
    %96 = arith.addf %95, %12 : vector<8x128xf32>
    %97 = arith.mulf %85, %96 : vector<8x128xf32>
    %98 = arith.addf %94, %97 : vector<8x128xf32>
    %99 = math.tanh %98 : vector<8x128xf32>
    %cst_24 = arith.constant 1.000000e+00 : f32
    %100 = vector.broadcast %cst_24 : f32 to vector<8x128xf32>
    %101 = arith.subf %100, %93 : vector<8x128xf32>
    %102 = arith.mulf %101, %99 : vector<8x128xf32>
    %103 = arith.mulf %93, %74 : vector<8x128xf32>
    %104 = arith.addf %102, %103 : vector<8x128xf32>
    %c0_25 = arith.constant 0 : index
    %c0_26 = arith.constant 0 : index
    %c0_27 = arith.constant 0 : index
    %105 = vector.load %arg9[%c0_25, %c0_26, %c0_27] : memref<1x8x128xf32, #tpu.memory_space<vmem>>, vector<1x8x128xf32>
    %106 = vector.shape_cast %105 : vector<1x8x128xf32> to vector<8x128xf32>
    %107 = vector.shape_cast %104 : vector<8x128xf32> to vector<1x8x128xf32>
    tpu.vector_store %arg9[%c0_25, %c0_26, %c0_27], %107 {strides = array<i32>} : memref<1x8x128xf32, #tpu.memory_space<vmem>>, vector<1x8x128xf32>,
    %108 = arith.truncf %44 : vector<8x128xf32> to vector<8x128xbf16>
    %c0_28 = arith.constant 0 : index
    %c0_29 = arith.constant 0 : index
    %109 = vector.load %arg6[%c0_28, %c0_29] : memref<128x128xbf16, #tpu.memory_space<vmem>>, vector<128x128xbf16>
    %cst_30 = arith.constant dense<0.000000e+00> : vector<8x128xf32>
    %110 = tpu.matmul %108, %109, %cst_30 {dimension_numbers = #tpu.dot_dimension_numbers<[1], [0], [0], [1], [0, 0, 1, 1], [], []>} : vector<8x128xbf16>, vector<128x128xbf16>, vector<8x128xf32> -> vector<8x128xf32>
    %c0_31 = arith.constant 0 : index
    %c0_32 = arith.constant 0 : index
    %111 = vector.load %arg7[%c0_31, %c0_32] : memref<1x128xf32, #tpu.memory_space<vmem>>, vector<1x128xf32>
    %112 = vector.broadcast %111 : vector<1x128xf32> to vector<8x128xf32>
    %113 = arith.addf %110, %112 : vector<8x128xf32>
    %cst_33 = arith.constant dense<0xFF800000> : vector<8xf32>
    %114 = vector.multi_reduction <maximumf>, %113, %cst_33 [1] : vector<8x128xf32> to vector<8xf32>
    %115 = vector.shape_cast %114 : vector<8xf32> to vector<8x1xf32>
    %116 = vector.broadcast %115 : vector<8x1xf32> to vector<8x128xf32>
    %117 = arith.subf %113, %116 : vector<8x128xf32>
    %118 = math.exp %117 : vector<8x128xf32>
    %cst_34 = arith.constant dense<0.000000e+00> : vector<8xf32>
    %119 = vector.multi_reduction <add>, %118, %cst_34 [1] : vector<8x128xf32> to vector<8xf32>
    %120 = vector.shape_cast %119 : vector<8xf32> to vector<8x1xf32>
    %121 = math.log %120 : vector<8x1xf32>
    %122 = vector.broadcast %121 : vector<8x1xf32> to vector<8x128xf32>
    %123 = arith.subf %117, %122 : vector<8x128xf32>
    %c0_35 = arith.constant 0 : index
    %c0_36 = arith.constant 0 : index
    %124 = vector.load %arg8[%c0_35, %c0_36] : memref<8x128xf32, #tpu.memory_space<vmem>>, vector<8x128xf32>
    tpu.vector_store %arg8[%c0_35, %c0_36], %123 {strides = array<i32>} : memref<8x128xf32, #tpu.memory_space<vmem>>, vector<8x128xf32>,
    return
  }
}

</mosaic_0001>

<llo_original>
// kernel: decoder_rnn_forward.1
$region0: #{decoder_rnn_forward.1}
  #allocation0 [shape = 'u32[]', space=smem, size = 0x4, offset = 0x4, fixed_abs, tag = 'smem constant byte address 0x4 - core index']
  #allocation1 [shape = 'u32[144,128]{1,0:T(1,128)}', space=vmem, size = 0x12000, scoped, tag = 'internal scratch']
  %s0 = inlined_call_operand.vmem [shape: f32[24,128], index: 0, kind: input, shape index: {}]
  %s1 = inlined_call_operand.vmem [shape: f32[1,8,128], index: 1, kind: input, shape index: {}]
  %s2 = inlined_call_operand.hbm [shape: bf16[128,384], index: 2, kind: input, shape index: {}]
  %s3 = inlined_call_operand.hbm [shape: bf16[128,384], index: 3, kind: input, shape index: {}]
  %s4 = inlined_call_operand.vmem [shape: f32[1,384], index: 4, kind: input, shape index: {}]
  %s5 = inlined_call_operand.vmem [shape: f32[1,128], index: 5, kind: input, shape index: {}]
  %s6 = inlined_call_operand.hbm [shape: bf16[128,128], index: 6, kind: input, shape index: {}]
  %s7 = inlined_call_operand.vmem [shape: f32[1,128], index: 7, kind: input, shape index: {}]
  %s8 = inlined_call_operand.vmem [shape: f32[8,128], index: 8, kind: output, shape index: {0}]
  %s9 = inlined_call_operand.vmem [shape: f32[1,8,128], index: 9, kind: output, shape index: {1}]
  %10 = xla_tuple %s8, %s9
  %s11 = sld [smem:[#allocation0]]
  $region62: #{decoder_rnn_forward.1} parent=0
    _
  %s13 = ssub.s32 1, %s11
  %s14 = scalar_select 0, %s13, %s11
  $region1: #{decoder_rnn_forward.1} parent=0
    #allocation2 [shape = 'u8[98304]{0}', space=vmem, size = 0x18000, scoped, tag = 'input window, operand 2, single buffered']
    #allocation3 [shape = 's32[1]{0}', space=sflag, size = 0x4, scoped, tag = 'scoped memory for decoder_rnn_forward.1']
    #allocation4 [shape = 'u8[98304]{0}', space=vmem, size = 0x18000, scoped, tag = 'input window, operand 3, single buffered']
    #allocation5 [shape = 's32[1]{0}', space=sflag, size = 0x4, scoped, tag = 'scoped memory for decoder_rnn_forward.1']
    #allocation6 [shape = 'u8[32768]{0}', space=vmem, size = 0x8000, scoped, tag = 'input window, operand 6, single buffered']
    %15 = vsyncpa [#allocation3], 0
    %16 = vsyncpa [#allocation5], 0
    // Predicated region
    $region2: #{decoder_rnn_forward.1} parent=1 // pred_check
      _
    $region3: #{decoder_rnn_forward.1} parent=1 // pred_check_branch
      %18 = sbr.rel (0) target = $region5
    $region4: #{decoder_rnn_forward.1} parent=1 // pred_region
      _
    $region5: #{decoder_rnn_forward.1} parent=1 // pred_fallthru
      _
    // Predicated region
    $region6: #{decoder_rnn_forward.1} parent=1 // pred_check
      _
    $region7: #{decoder_rnn_forward.1} parent=1 // pred_check_branch
      %20 = sbr.rel (0) target = $region9
    $region8: #{decoder_rnn_forward.1} parent=1 // pred_region
      _
    $region9: #{decoder_rnn_forward.1} parent=1 // pred_fallthru
      _
    // Predicated region
    $region10: #{decoder_rnn_forward.1} parent=1 // pred_check
      _
    $region11: #{decoder_rnn_forward.1} parent=1 // pred_check_branch
      %22 = sbr.rel (0) target = $region13
    $region12: #{decoder_rnn_forward.1} parent=1 // pred_region
      %s24 = ssub.s32 3072, 3072
      %25 = vsyncadd [#allocation3], %s24
      %s26 = sshll.u32 [#allocation2], 4
      %s27 = int_to_ptr.vmem [resolvable:$true] %s26
      %32 = dma.hbm_to_vmem [thread:$0]  %s2, 3072, %s27, [#allocation3], 192, 192, 12
    $region13: #{decoder_rnn_forward.1} parent=1 // pred_fallthru
      _
    // Predicated region
    $region14: #{decoder_rnn_forward.1} parent=1 // pred_check
      _
    $region15: #{decoder_rnn_forward.1} parent=1 // pred_check_branch
      %34 = sbr.rel (0) target = $region17
    $region16: #{decoder_rnn_forward.1} parent=1 // pred_region
      %s36 = ssub.s32 3072, 3072
      %37 = vsyncadd [#allocation5], %s36
      %s38 = sshll.u32 [#allocation4], 4
      %s39 = int_to_ptr.vmem [resolvable:$true] %s38
      %44 = dma.hbm_to_vmem [thread:$0]  %s3, 3072, %s39, [#allocation5], 192, 192, 12
    $region17: #{decoder_rnn_forward.1} parent=1 // pred_fallthru
      _
    // Predicated region
    $region18: #{decoder_rnn_forward.1} parent=1 // pred_check
      _
    $region19: #{decoder_rnn_forward.1} parent=1 // pred_check_branch
      %46 = sbr.rel (0) target = $region21
    $region20: #{decoder_rnn_forward.1} parent=1 // pred_region
      _
    $region21: #{decoder_rnn_forward.1} parent=1 // pred_fallthru
      _
    // Predicated region
    $region22: #{decoder_rnn_forward.1} parent=1 // pred_check
      _
    $region23: #{decoder_rnn_forward.1} parent=1 // pred_check_branch
      %48 = sbr.rel (0) target = $region25
    $region24: #{decoder_rnn_forward.1} parent=1 // pred_region
      _
    $region25: #{decoder_rnn_forward.1} parent=1 // pred_fallthru
      _
    // Predicated region
    $region26: #{decoder_rnn_forward.1} parent=1 // pred_check
      _
    $region27: #{decoder_rnn_forward.1} parent=1 // pred_check_branch
      %50 = sbr.rel (0) target = $region29
    $region28: #{decoder_rnn_forward.1} parent=1 // pred_region
      %s52 = ssub.s32 1024, 1024
      %53 = vsyncadd [#allocation5], %s52
      %s54 = sshll.u32 [#allocation6], 4
      %s55 = int_to_ptr.vmem [resolvable:$true] %s54
      %60 = dma.hbm_to_vmem [thread:$0]  %s6, 1024, %s55, [#allocation5], 64, 64, 4
    $region29: #{decoder_rnn_forward.1} parent=1 // pred_fallthru
      _
    // Predicated region
    $region30: #{decoder_rnn_forward.1} parent=1 // pred_check
      _
    $region31: #{decoder_rnn_forward.1} parent=1 // pred_check_branch
      %62 = sbr.rel (0) target = $region33
    $region32: #{decoder_rnn_forward.1} parent=1 // pred_region
      _
    $region33: #{decoder_rnn_forward.1} parent=1 // pred_fallthru
      _
    // Predicated region
    $region34: #{decoder_rnn_forward.1} parent=1 // pred_check
      _
    $region35: #{decoder_rnn_forward.1} parent=1 // pred_check_branch
      %64 = sbr.rel (0) target = $region37
    $region36: #{decoder_rnn_forward.1} parent=1 // pred_region
      %65 = dma.done [#allocation3], 3072
    $region37: #{decoder_rnn_forward.1} parent=1 // pred_fallthru
      _
    // Predicated region
    $region38: #{decoder_rnn_forward.1} parent=1 // pred_check
      _
    $region39: #{decoder_rnn_forward.1} parent=1 // pred_check_branch
      %67 = sbr.rel (0) target = $region41
    $region40: #{decoder_rnn_forward.1} parent=1 // pred_region
      %68 = dma.done [#allocation5], 3072
    $region41: #{decoder_rnn_forward.1} parent=1 // pred_fallthru
      _
    // Predicated region
    $region42: #{decoder_rnn_forward.1} parent=1 // pred_check
      _
    $region43: #{decoder_rnn_forward.1} parent=1 // pred_check_branch
      %70 = sbr.rel (0) target = $region45
    $region44: #{decoder_rnn_forward.1} parent=1 // pred_region
      %71 = dma.done [#allocation5], 1024
    $region45: #{decoder_rnn_forward.1} parent=1 // pred_fallthru
      _
    %v73 = vld [vmem:[%s0] sm:$0xff]
    %v74 = vld [vmem:[%s0 + $0x8] sm:$0xff]
    %v75 = vld [vmem:[%s0 + $0x10] sm:$0xff]
    %v76 = vmax.f32 %v73, 0.0
    %v77 = vmax.f32 %v74, 0.0
    %v78 = vmax.f32 %v75, 0.0
    %v79 = vpack.c.bf16 %v77, %v76
    %v80 = vpack.c.bf16 %v78, %v78
    %v81 = vld [vmem:[#allocation2] sm:$0xff]
    %v82 = vld [vmem:[#allocation2 + $0x8] sm:$0xf]
    %v83 = vld [vmem:[#allocation2 + $0xc] sm:$0xff]
    %v84 = vld [vmem:[#allocation2 + $0x14] sm:$0xf]
    %v85 = vld [vmem:[#allocation2 + $0x18] sm:$0xff]
    %v86 = vld [vmem:[#allocation2 + $0x20] sm:$0xf]
    %v87 = vld [vmem:[#allocation2 + $0x24] sm:$0xff]
    %v88 = vld [vmem:[#allocation2 + $0x2c] sm:$0xf]
    %v89 = vld [vmem:[#allocation2 + $0x30] sm:$0xff]
    %v90 = vld [vmem:[#allocation2 + $0x38] sm:$0xf]
    %v91 = vld [vmem:[#allocation2 + $0x3c] sm:$0xff]
    %v92 = vld [vmem:[#allocation2 + $0x44] sm:$0xf]
    %v93 = vld [vmem:[#allocation2 + $0x48] sm:$0xff]
    %v94 = vld [vmem:[#allocation2 + $0x50] sm:$0xf]
    %v95 = vld [vmem:[#allocation2 + $0x54] sm:$0xff]
    %v96 = vld [vmem:[#allocation2 + $0x5c] sm:$0xf]
    %v97 = vld [vmem:[#allocation2 + $0x60] sm:$0xff]
    %v98 = vld [vmem:[#allocation2 + $0x68] sm:$0xf]
    %v99 = vld [vmem:[#allocation2 + $0x6c] sm:$0xff]
    %v100 = vld [vmem:[#allocation2 + $0x74] sm:$0xf]
    %v101 = vld [vmem:[#allocation2 + $0x78] sm:$0xff]
    %v102 = vld [vmem:[#allocation2 + $0x80] sm:$0xf]
    %v103 = vld [vmem:[#allocation2 + $0x84] sm:$0xff]
    %v104 = vld [vmem:[#allocation2 + $0x8c] sm:$0xf]
    %v105 = vld [vmem:[#allocation2 + $0x90] sm:$0xff]
    %v106 = vld [vmem:[#allocation2 + $0x98] sm:$0xf]
    %v107 = vld [vmem:[#allocation2 + $0x9c] sm:$0xff]
    %v108 = vld [vmem:[#allocation2 + $0xa4] sm:$0xf]
    %v109 = vld [vmem:[#allocation2 + $0xa8] sm:$0xff]
    %v110 = vld [vmem:[#allocation2 + $0xb0] sm:$0xf]
    %v111 = vld [vmem:[#allocation2 + $0xb4] sm:$0xff]
    %v112 = vld [vmem:[#allocation2 + $0xbc] sm:$0xf]
    %v113 = vld [vmem:[%s4] sm:$0x7]
    %v115 = vlaneseq
    %v116 = vshrl.u32 %v115, 7
    %v117 = vsub.s32 0, %v116
    %v118 = vrot.slane %v113, %v117
    %v119 = vlaneseq
    %v120 = vshrl.u32 %v119, 7
    %v121 = vsub.s32 1, %v120
    %v122 = vrot.slane %v113, %v121
    %v123 = vlaneseq
    %v124 = vshrl.u32 %v123, 7
    %v125 = vsub.s32 2, %v124
    %v126 = vrot.slane %v113, %v125
    %v162 = vunpack.c.l.b16 %v81
    %v163 = vunpack.c.h.b16 %v81
    %v164 = vunpack.c.l.b16 %v82
    %v165 = vunpack.c.l.b16 %v83
    %v166 = vunpack.c.h.b16 %v83
    %v167 = vunpack.c.l.b16 %v84
    %v168 = vunpack.c.l.b16 %v85
    %v169 = vunpack.c.h.b16 %v85
    %v170 = vunpack.c.l.b16 %v86
    %v171 = vunpack.c.l.b16 %v87
    %v172 = vunpack.c.h.b16 %v87
    %v173 = vunpack.c.l.b16 %v88
    %v174 = vunpack.c.l.b16 %v89
    %v175 = vunpack.c.h.b16 %v89
    %v176 = vunpack.c.l.b16 %v90
    %v177 = vunpack.c.l.b16 %v91
    %v178 = vunpack.c.h.b16 %v91
    %v179 = vunpack.c.l.b16 %v92
    %v180 = vunpack.c.l.b16 %v93
    %v181 = vunpack.c.h.b16 %v93
    %v182 = vunpack.c.l.b16 %v94
    %v183 = vunpack.c.l.b16 %v95
    %v184 = vunpack.c.h.b16 %v95
    %v185 = vunpack.c.l.b16 %v96
    %v186 = vunpack.c.l.b16 %v97
    %v187 = vunpack.c.h.b16 %v97
    %v188 = vunpack.c.l.b16 %v98
    %v189 = vunpack.c.l.b16 %v99
    %v190 = vunpack.c.h.b16 %v99
    %v191 = vunpack.c.l.b16 %v100
    %v192 = vunpack.c.l.b16 %v101
    %v193 = vunpack.c.h.b16 %v101
    %v194 = vunpack.c.l.b16 %v102
    %v195 = vunpack.c.l.b16 %v103
    %v196 = vunpack.c.h.b16 %v103
    %v197 = vunpack.c.l.b16 %v104
    %v198 = vunpack.c.l.b16 %v105
    %v199 = vunpack.c.h.b16 %v105
    %v200 = vunpack.c.l.b16 %v106
    %v201 = vunpack.c.l.b16 %v107
    %v202 = vunpack.c.h.b16 %v107
    %v203 = vunpack.c.l.b16 %v108
    %v204 = vunpack.c.l.b16 %v109
    %v205 = vunpack.c.h.b16 %v109
    %v206 = vunpack.c.l.b16 %v110
    %v207 = vunpack.c.l.b16 %v111
    %v208 = vunpack.c.h.b16 %v111
    %v209 = vunpack.c.l.b16 %v112
    %v210 = vpack.c.b16 %v165, %v162
    %v211 = vpack.c.b16 %v166, %v163
    %v212 = vpack.c.b16 %v167, %v164
    %v213 = vpack.c.b16 %v171, %v168
    %v214 = vpack.c.b16 %v172, %v169
    %v215 = vpack.c.b16 %v173, %v170
    %v216 = vpack.c.b16 %v177, %v174
    %v217 = vpack.c.b16 %v178, %v175
    %v218 = vpack.c.b16 %v179, %v176
    %v219 = vpack.c.b16 %v183, %v180
    %v220 = vpack.c.b16 %v184, %v181
    %v221 = vpack.c.b16 %v185, %v182
    %v222 = vpack.c.b16 %v189, %v186
    %v223 = vpack.c.b16 %v190, %v187
    %v224 = vpack.c.b16 %v191, %v188
    %v225 = vpack.c.b16 %v195, %v192
    %v226 = vpack.c.b16 %v196, %v193
    %v227 = vpack.c.b16 %v197, %v194
    %v228 = vpack.c.b16 %v201, %v198
    %v229 = vpack.c.b16 %v202, %v199
    %v230 = vpack.c.b16 %v203, %v200
    %v231 = vpack.c.b16 %v207, %v204
    %v232 = vpack.c.b16 %v208, %v205
    %v233 = vpack.c.b16 %v209, %v206
    %258 = vmatprep.subr.bf16.mxu0 %v232
    %259 = vmatpush1.bf16.msra.mxu0 %v231
    %260 = vmatprep.subr.bf16.mxu0 %v229
    %261 = vmatpush1.bf16.msra.mxu0 %v228
    %262 = vmatprep.subr.bf16.mxu0 %v226
    %263 = vmatpush1.bf16.msra.mxu0 %v225
    %264 = vmatprep.subr.bf16.mxu0 %v223
    %265 = vmatpush1.bf16.msra.mxu0 %v222
    %266 = vmatprep.subr.bf16.mxu0 %v220
    %267 = vmatpush1.bf16.msra.mxu0 %v219
    %268 = vmatprep.subr.bf16.mxu0 %v217
    %269 = vmatpush1.bf16.msra.mxu0 %v216
    %270 = vmatprep.subr.bf16.mxu0 %v214
    %271 = vmatpush1.bf16.msra.mxu0 %v213
    %272 = vmatprep.subr.bf16.mxu0 %v211
    %273 = vmatpush1.bf16.msra.mxu0 %v210
    %274 = vmatprep.subr.bf16.mxu0 0
    %275 = vmatpush2.bf16.msra.mxu0 0
    %276 = vmatprep.subr.bf16.mxu0 0
    %277 = vmatpush2.bf16.msra.mxu0 0
    %278 = vmatprep.subr.bf16.mxu0 0
    %279 = vmatpush2.bf16.msra.mxu0 0
    %280 = vmatprep.subr.bf16.mxu0 0
    %281 = vmatpush2.bf16.msra.mxu0 0
    %282 = vmatprep.subr.bf16.mxu0 0
    %283 = vmatpush2.bf16.msra.mxu0 0
    %284 = vmatprep.subr.bf16.mxu0 0
    %285 = vmatpush2.bf16.msra.mxu0 0
    %286 = vmatprep.subr.bf16.mxu0 0
    %287 = vmatpush2.bf16.msra.mxu0 0
    %288 = vmatprep.subr.bf16.mxu0 0
    %289 = vmatpush2.bf16.msra.mxu0 0
    %290 = vmatprep.mubr.bf16.mxu0 0
    %291 = vmatmul.mubr.bf16.gmra.mxu0 %v79
    %v292 = vpop.f32.mrf.mxu0
    %v293 = vadd.f32 %v118, %v292
    %v294 = vpop.f32.mrf.mxu0
    %v295 = vadd.f32 %v122, %v294
    %v296 = vpop.f32.mrf.mxu0
    %v297 = vadd.f32 %v118, %v296
    %v298 = vpop.f32.mrf.mxu0
    %v299 = vadd.f32 %v122, %v298
    %300 = vmatprep.mubr.bf16.mxu0 0
    %301 = vmatmul.mubr.bf16.gmra.mxu0 %v80
    %v302 = vpop.f32.mrf.mxu0
    %v303 = vadd.f32 %v118, %v302
    %v304 = vpop.f32.mrf.mxu0
    %v305 = vadd.f32 %v122, %v304
    %v306 = vpop.f32.mrf.mxu0
    %v307 = vpop.f32.mrf.mxu0
    %308 = vdwg.mxu0
    %309 = vmatprep.subr.bf16.mxu0 0
    %310 = vmatpush1.bf16.msra.mxu0 %v233
    %311 = vmatprep.subr.bf16.mxu0 0
    %312 = vmatpush1.bf16.msra.mxu0 %v230
    %313 = vmatprep.subr.bf16.mxu0 0
    %314 = vmatpush1.bf16.msra.mxu0 %v227
    %315 = vmatprep.subr.bf16.mxu0 0
    %316 = vmatpush1.bf16.msra.mxu0 %v224
    %317 = vmatprep.subr.bf16.mxu0 0
    %318 = vmatpush1.bf16.msra.mxu0 %v221
    %319 = vmatprep.subr.bf16.mxu0 0
    %320 = vmatpush1.bf16.msra.mxu0 %v218
    %321 = vmatprep.subr.bf16.mxu0 0
    %322 = vmatpush1.bf16.msra.mxu0 %v215
    %323 = vmatprep.subr.bf16.mxu0 0
    %324 = vmatpush1.bf16.msra.mxu0 %v212
    %325 = vmatprep.subr.bf16.mxu0 0
    %326 = vmatpush2.bf16.msra.mxu0 0
    %327 = vmatprep.subr.bf16.mxu0 0
    %328 = vmatpush2.bf16.msra.mxu0 0
    %329 = vmatprep.subr.bf16.mxu0 0
    %330 = vmatpush2.bf16.msra.mxu0 0
    %331 = vmatprep.subr.bf16.mxu0 0
    %332 = vmatpush2.bf16.msra.mxu0 0
    %333 = vmatprep.subr.bf16.mxu0 0
    %334 = vmatpush2.bf16.msra.mxu0 0
    %335 = vmatprep.subr.bf16.mxu0 0
    %336 = vmatpush2.bf16.msra.mxu0 0
    %337 = vmatprep.subr.bf16.mxu0 0
    %338 = vmatpush2.bf16.msra.mxu0 0
    %339 = vmatprep.subr.bf16.mxu0 0
    %340 = vmatpush2.bf16.msra.mxu0 0
    %341 = vmatprep.mubr.bf16.mxu0 0
    %342 = vmatmul.mubr.bf16.gmra.mxu0 %v79
    %v343 = vpop.f32.mrf.mxu0
    %v344 = vadd.f32 %v126, %v343
    %v345 = vpop.f32.mrf.mxu0
    %v346 = vpop.f32.mrf.mxu0
    %v347 = vadd.f32 %v126, %v346
    %v348 = vpop.f32.mrf.mxu0
    %349 = vmatprep.mubr.bf16.mxu0 0
    %350 = vmatmul.mubr.bf16.gmra.mxu0 %v80
    %v351 = vpop.f32.mrf.mxu0
    %v352 = vadd.f32 %v126, %v351
    %v353 = vpop.f32.mrf.mxu0
    %v354 = vpop.f32.mrf.mxu0
    %v355 = vpop.f32.mrf.mxu0
    %356 = vdwg.mxu0
    %v357 = vld [vmem:[#allocation4] sm:$0xff]
    %v358 = vld [vmem:[#allocation4 + $0x8] sm:$0xf]
    %v359 = vld [vmem:[#allocation4 + $0xc] sm:$0xff]
    %v360 = vld [vmem:[#allocation4 + $0x14] sm:$0xf]
    %v361 = vld [vmem:[#allocation4 + $0x18] sm:$0xff]
    %v362 = vld [vmem:[#allocation4 + $0x20] sm:$0xf]
    %v363 = vld [vmem:[#allocation4 + $0x24] sm:$0xff]
    %v364 = vld [vmem:[#allocation4 + $0x2c] sm:$0xf]
    %v365 = vld [vmem:[#allocation4 + $0x30] sm:$0xff]
    %v366 = vld [vmem:[#allocation4 + $0x38] sm:$0xf]
    %v367 = vld [vmem:[#allocation4 + $0x3c] sm:$0xff]
    %v368 = vld [vmem:[#allocation4 + $0x44] sm:$0xf]
    %v369 = vld [vmem:[#allocation4 + $0x48] sm:$0xff]
    %v370 = vld [vmem:[#allocation4 + $0x50] sm:$0xf]
    %v371 = vld [vmem:[#allocation4 + $0x54] sm:$0xff]
    %v372 = vld [vmem:[#allocation4 + $0x5c] sm:$0xf]
    %v373 = vld [vmem:[#allocation4 + $0x60] sm:$0xff]
    %v374 = vld [vmem:[#allocation4 + $0x68] sm:$0xf]
    %v375 = vld [vmem:[#allocation4 + $0x6c] sm:$0xff]
    %v376 = vld [vmem:[#allocation4 + $0x74] sm:$0xf]
    %v377 = vld [vmem:[#allocation4 + $0x78] sm:$0xff]
    %v378 = vld [vmem:[#allocation4 + $0x80] sm:$0xf]
    %v379 = vld [vmem:[#allocation4 + $0x84] sm:$0xff]
    %v380 = vld [vmem:[#allocation4 + $0x8c] sm:$0xf]
    %v381 = vld [vmem:[#allocation4 + $0x90] sm:$0xff]
    %v382 = vld [vmem:[#allocation4 + $0x98] sm:$0xf]
    %v383 = vld [vmem:[#allocation4 + $0x9c] sm:$0xff]
    %v384 = vld [vmem:[#allocation4 + $0xa4] sm:$0xf]
    %v385 = vld [vmem:[#allocation4 + $0xa8] sm:$0xff]
    %v386 = vld [vmem:[#allocation4 + $0xb0] sm:$0xf]
    %v387 = vld [vmem:[#allocation4 + $0xb4] sm:$0xff]
    %v388 = vld [vmem:[#allocation4 + $0xbc] sm:$0xf]
    %v389 = vld [vmem:[%s5] sm:$0x1]
    %v391 = vlaneseq
    %v392 = vshrl.u32 %v391, 7
    %v393 = vsub.s32 0, %v392
    %v394 = vrot.slane %v389, %v393
    %v396 = vld [vmem:[%s1] sm:$0xff]
    %v397 = vpack.c.bf16 %v396, %v396
    %v430 = vunpack.c.l.b16 %v357
    %v431 = vunpack.c.h.b16 %v357
    %v432 = vunpack.c.l.b16 %v358
    %v433 = vunpack.c.l.b16 %v359
    %v434 = vunpack.c.h.b16 %v359
    %v435 = vunpack.c.l.b16 %v360
    %v436 = vunpack.c.l.b16 %v361
    %v437 = vunpack.c.h.b16 %v361
    %v438 = vunpack.c.l.b16 %v362
    %v439 = vunpack.c.l.b16 %v363
    %v440 = vunpack.c.h.b16 %v363
    %v441 = vunpack.c.l.b16 %v364
    %v442 = vunpack.c.l.b16 %v365
    %v443 = vunpack.c.h.b16 %v365
    %v444 = vunpack.c.l.b16 %v366
    %v445 = vunpack.c.l.b16 %v367
    %v446 = vunpack.c.h.b16 %v367
    %v447 = vunpack.c.l.b16 %v368
    %v448 = vunpack.c.l.b16 %v369
    %v449 = vunpack.c.h.b16 %v369
    %v450 = vunpack.c.l.b16 %v370
    %v451 = vunpack.c.l.b16 %v371
    %v452 = vunpack.c.h.b16 %v371
    %v453 = vunpack.c.l.b16 %v372
    %v454 = vunpack.c.l.b16 %v373
    %v455 = vunpack.c.h.b16 %v373
    %v456 = vunpack.c.l.b16 %v374
    %v457 = vunpack.c.l.b16 %v375
    %v458 = vunpack.c.h.b16 %v375
    %v459 = vunpack.c.l.b16 %v376
    %v460 = vunpack.c.l.b16 %v377
    %v461 = vunpack.c.h.b16 %v377
    %v462 = vunpack.c.l.b16 %v378
    %v463 = vunpack.c.l.b16 %v379
    %v464 = vunpack.c.h.b16 %v379
    %v465 = vunpack.c.l.b16 %v380
    %v466 = vunpack.c.l.b16 %v381
    %v467 = vunpack.c.h.b16 %v381
    %v468 = vunpack.c.l.b16 %v382
    %v469 = vunpack.c.l.b16 %v383
    %v470 = vunpack.c.h.b16 %v383
    %v471 = vunpack.c.l.b16 %v384
    %v472 = vunpack.c.l.b16 %v385
    %v473 = vunpack.c.h.b16 %v385
    %v474 = vunpack.c.l.b16 %v386
    %v475 = vunpack.c.l.b16 %v387
    %v476 = vunpack.c.h.b16 %v387
    %v477 = vunpack.c.l.b16 %v388
    %v478 = vpack.c.b16 %v433, %v430
    %v479 = vpack.c.b16 %v434, %v431
    %v480 = vpack.c.b16 %v435, %v432
    %v481 = vpack.c.b16 %v439, %v436
    %v482 = vpack.c.b16 %v440, %v437
    %v483 = vpack.c.b16 %v441, %v438
    %v484 = vpack.c.b16 %v445, %v442
    %v485 = vpack.c.b16 %v446, %v443
    %v486 = vpack.c.b16 %v447, %v444
    %v487 = vpack.c.b16 %v451, %v448
    %v488 = vpack.c.b16 %v452, %v449
    %v489 = vpack.c.b16 %v453, %v450
    %v490 = vpack.c.b16 %v457, %v454
    %v491 = vpack.c.b16 %v458, %v455
    %v492 = vpack.c.b16 %v459, %v456
    %v493 = vpack.c.b16 %v463, %v460
    %v494 = vpack.c.b16 %v464, %v461
    %v495 = vpack.c.b16 %v465, %v462
    %v496 = vpack.c.b16 %v469, %v466
    %v497 = vpack.c.b16 %v470, %v467
    %v498 = vpack.c.b16 %v471, %v468
    %v499 = vpack.c.b16 %v475, %v472
    %v500 = vpack.c.b16 %v476, %v473
    %v501 = vpack.c.b16 %v477, %v474
    %526 = vmatprep.subr.bf16.mxu0 %v500
    %527 = vmatpush1.bf16.msra.mxu0 %v499
    %528 = vmatprep.subr.bf16.mxu0 %v497
    %529 = vmatpush1.bf16.msra.mxu0 %v496
    %530 = vmatprep.subr.bf16.mxu0 %v494
    %531 = vmatpush1.bf16.msra.mxu0 %v493
    %532 = vmatprep.subr.bf16.mxu0 %v491
    %533 = vmatpush1.bf16.msra.mxu0 %v490
    %534 = vmatprep.subr.bf16.mxu0 %v488
    %535 = vmatpush1.bf16.msra.mxu0 %v487
    %536 = vmatprep.subr.bf16.mxu0 %v485
    %537 = vmatpush1.bf16.msra.mxu0 %v484
    %538 = vmatprep.subr.bf16.mxu0 %v482
    %539 = vmatpush1.bf16.msra.mxu0 %v481
    %540 = vmatprep.subr.bf16.mxu0 %v479
    %541 = vmatpush1.bf16.msra.mxu0 %v478
    %542 = vmatprep.subr.bf16.mxu0 0
    %543 = vmatpush2.bf16.msra.mxu0 0
    %544 = vmatprep.subr.bf16.mxu0 0
    %545 = vmatpush2.bf16.msra.mxu0 0
    %546 = vmatprep.subr.bf16.mxu0 0
    %547 = vmatpush2.bf16.msra.mxu0 0
    %548 = vmatprep.subr.bf16.mxu0 0
    %549 = vmatpush2.bf16.msra.mxu0 0
    %550 = vmatprep.subr.bf16.mxu0 0
    %551 = vmatpush2.bf16.msra.mxu0 0
    %552 = vmatprep.subr.bf16.mxu0 0
    %553 = vmatpush2.bf16.msra.mxu0 0
    %554 = vmatprep.subr.bf16.mxu0 0
    %555 = vmatpush2.bf16.msra.mxu0 0
    %556 = vmatprep.subr.bf16.mxu0 0
    %557 = vmatpush2.bf16.msra.mxu0 0
    %558 = vmatprep.mubr.bf16.mxu0 0
    %559 = vmatmul.mubr.bf16.gmra.mxu0 %v397
    %v560 = vpop.f32.mrf.mxu0
    %v561 = vadd.f32 0.0, %v560
    %v562 = vpop.f32.mrf.mxu0
    %v563 = vadd.f32 0.0, %v562
    %v564 = vpop.f32.mrf.mxu0
    %v565 = vpop.f32.mrf.mxu0
    %566 = vdwg.mxu0
    %567 = vmatprep.subr.bf16.mxu0 0
    %568 = vmatpush1.bf16.msra.mxu0 %v501
    %569 = vmatprep.subr.bf16.mxu0 0
    %570 = vmatpush1.bf16.msra.mxu0 %v498
    %571 = vmatprep.subr.bf16.mxu0 0
    %572 = vmatpush1.bf16.msra.mxu0 %v495
    %573 = vmatprep.subr.bf16.mxu0 0
    %574 = vmatpush1.bf16.msra.mxu0 %v492
    %575 = vmatprep.subr.bf16.mxu0 0
    %576 = vmatpush1.bf16.msra.mxu0 %v489
    %577 = vmatprep.subr.bf16.mxu0 0
    %578 = vmatpush1.bf16.msra.mxu0 %v486
    %579 = vmatprep.subr.bf16.mxu0 0
    %580 = vmatpush1.bf16.msra.mxu0 %v483
    %581 = vmatprep.subr.bf16.mxu0 0
    %582 = vmatpush1.bf16.msra.mxu0 %v480
    %583 = vmatprep.subr.bf16.mxu0 0
    %584 = vmatpush2.bf16.msra.mxu0 0
    %585 = vmatprep.subr.bf16.mxu0 0
    %586 = vmatpush2.bf16.msra.mxu0 0
    %587 = vmatprep.subr.bf16.mxu0 0
    %588 = vmatpush2.bf16.msra.mxu0 0
    %589 = vmatprep.subr.bf16.mxu0 0
    %590 = vmatpush2.bf16.msra.mxu0 0
    %591 = vmatprep.subr.bf16.mxu0 0
    %592 = vmatpush2.bf16.msra.mxu0 0
    %593 = vmatprep.subr.bf16.mxu0 0
    %594 = vmatpush2.bf16.msra.mxu0 0
    %595 = vmatprep.subr.bf16.mxu0 0
    %596 = vmatpush2.bf16.msra.mxu0 0
    %597 = vmatprep.subr.bf16.mxu0 0
    %598 = vmatpush2.bf16.msra.mxu0 0
    %599 = vmatprep.mubr.bf16.mxu0 0
    %600 = vmatmul.mubr.bf16.gmra.mxu0 %v397
    %v601 = vpop.f32.mrf.mxu0
    %v602 = vadd.f32 0.0, %v601
    %v603 = vpop.f32.mrf.mxu0
    %v604 = vpop.f32.mrf.mxu0
    %v605 = vpop.f32.mrf.mxu0
    %606 = vdwg.mxu0
    %v607 = vadd.f32 %v293, %v561
    %v608 = vxor.u32 %v607, 2147483648
    %v609 = vmul.f32 %v608, 1.442695
    %v610 = vpow.pop %v609
    %v611 = vadd.f32 %v610, 1.0
    %v612 = vrcp.pop %v611
    %v613 = vmul.f32 1.0, %v612
    %v614 = vadd.f32 %v295, %v563
    %v615 = vxor.u32 %v614, 2147483648
    %v616 = vmul.f32 %v615, 1.442695
    %v617 = vpow.pop %v616
    %v618 = vadd.f32 %v617, 1.0
    %v619 = vrcp.pop %v618
    %v620 = vmul.f32 1.0, %v619
    %v621 = vadd.f32 %v602, %v394
    %v622 = vmul.f32 %v613, %v621
    %v623 = vadd.f32 %v344, %v622
    %v624 = vtanh.pop %v623
    %v625 = vsub.f32 1.0, %v620
    %v626 = vmul.f32 %v625, %v624
    %v627 = vmul.f32 %v620, %v396
    %v628 = vadd.f32 %v626, %v627
    %v629 = vpack.c.bf16 %v628, %v628
    %630 = vmatprep.subr.bf16.mxu0 %v500
    %631 = vmatpush1.bf16.msra.mxu0 %v499
    %632 = vmatprep.subr.bf16.mxu0 %v497
    %633 = vmatpush1.bf16.msra.mxu0 %v496
    %634 = vmatprep.subr.bf16.mxu0 %v494
    %635 = vmatpush1.bf16.msra.mxu0 %v493
    %636 = vmatprep.subr.bf16.mxu0 %v491
    %637 = vmatpush1.bf16.msra.mxu0 %v490
    %638 = vmatprep.subr.bf16.mxu0 %v488
    %639 = vmatpush1.bf16.msra.mxu0 %v487
    %640 = vmatprep.subr.bf16.mxu0 %v485
    %641 = vmatpush1.bf16.msra.mxu0 %v484
    %642 = vmatprep.subr.bf16.mxu0 %v482
    %643 = vmatpush1.bf16.msra.mxu0 %v481
    %644 = vmatprep.subr.bf16.mxu0 %v479
    %645 = vmatpush1.bf16.msra.mxu0 %v478
    %646 = vmatprep.subr.bf16.mxu0 0
    %647 = vmatpush2.bf16.msra.mxu0 0
    %648 = vmatprep.subr.bf16.mxu0 0
    %649 = vmatpush2.bf16.msra.mxu0 0
    %650 = vmatprep.subr.bf16.mxu0 0
    %651 = vmatpush2.bf16.msra.mxu0 0
    %652 = vmatprep.subr.bf16.mxu0 0
    %653 = vmatpush2.bf16.msra.mxu0 0
    %654 = vmatprep.subr.bf16.mxu0 0
    %655 = vmatpush2.bf16.msra.mxu0 0
    %656 = vmatprep.subr.bf16.mxu0 0
    %657 = vmatpush2.bf16.msra.mxu0 0
    %658 = vmatprep.subr.bf16.mxu0 0
    %659 = vmatpush2.bf16.msra.mxu0 0
    %660 = vmatprep.subr.bf16.mxu0 0
    %661 = vmatpush2.bf16.msra.mxu0 0
    %662 = vmatprep.mubr.bf16.mxu0 0
    %663 = vmatmul.mubr.bf16.gmra.mxu0 %v629
    %v664 = vpop.f32.mrf.mxu0
    %v665 = vadd.f32 0.0, %v664
    %v666 = vpop.f32.mrf.mxu0
    %v667 = vadd.f32 0.0, %v666
    %v668 = vpop.f32.mrf.mxu0
    %v669 = vpop.f32.mrf.mxu0
    %670 = vdwg.mxu0
    %671 = vmatprep.subr.bf16.mxu0 0
    %672 = vmatpush1.bf16.msra.mxu0 %v501
    %673 = vmatprep.subr.bf16.mxu0 0
    %674 = vmatpush1.bf16.msra.mxu0 %v498
    %675 = vmatprep.subr.bf16.mxu0 0
    %676 = vmatpush1.bf16.msra.mxu0 %v495
    %677 = vmatprep.subr.bf16.mxu0 0
    %678 = vmatpush1.bf16.msra.mxu0 %v492
    %679 = vmatprep.subr.bf16.mxu0 0
    %680 = vmatpush1.bf16.msra.mxu0 %v489
    %681 = vmatprep.subr.bf16.mxu0 0
    %682 = vmatpush1.bf16.msra.mxu0 %v486
    %683 = vmatprep.subr.bf16.mxu0 0
    %684 = vmatpush1.bf16.msra.mxu0 %v483
    %685 = vmatprep.subr.bf16.mxu0 0
    %686 = vmatpush1.bf16.msra.mxu0 %v480
    %687 = vmatprep.subr.bf16.mxu0 0
    %688 = vmatpush2.bf16.msra.mxu0 0
    %689 = vmatprep.subr.bf16.mxu0 0
    %690 = vmatpush2.bf16.msra.mxu0 0
    %691 = vmatprep.subr.bf16.mxu0 0
    %692 = vmatpush2.bf16.msra.mxu0 0
    %693 = vmatprep.subr.bf16.mxu0 0
    %694 = vmatpush2.bf16.msra.mxu0 0
    %695 = vmatprep.subr.bf16.mxu0 0
    %696 = vmatpush2.bf16.msra.mxu0 0
    %697 = vmatprep.subr.bf16.mxu0 0
    %698 = vmatpush2.bf16.msra.mxu0 0
    %699 = vmatprep.subr.bf16.mxu0 0
    %700 = vmatpush2.bf16.msra.mxu0 0
    %701 = vmatprep.subr.bf16.mxu0 0
    %702 = vmatpush2.bf16.msra.mxu0 0
    %703 = vmatprep.mubr.bf16.mxu0 0
    %704 = vmatmul.mubr.bf16.gmra.mxu0 %v629
    %v705 = vpop.f32.mrf.mxu0
    %v706 = vadd.f32 0.0, %v705
    %v707 = vpop.f32.mrf.mxu0
    %v708 = vpop.f32.mrf.mxu0
    %v709 = vpop.f32.mrf.mxu0
    %710 = vdwg.mxu0
    %v711 = vadd.f32 %v297, %v665
    %v712 = vxor.u32 %v711, 2147483648
    %v713 = vmul.f32 %v712, 1.442695
    %v714 = vpow.pop %v713
    %v715 = vadd.f32 %v714, 1.0
    %v716 = vrcp.pop %v715
    %v717 = vmul.f32 1.0, %v716
    %v718 = vadd.f32 %v299, %v667
    %v719 = vxor.u32 %v718, 2147483648
    %v720 = vmul.f32 %v719, 1.442695
    %v721 = vpow.pop %v720
    %v722 = vadd.f32 %v721, 1.0
    %v723 = vrcp.pop %v722
    %v724 = vmul.f32 1.0, %v723
    %v725 = vadd.f32 %v706, %v394
    %v726 = vmul.f32 %v717, %v725
    %v727 = vadd.f32 %v347, %v726
    %v728 = vtanh.pop %v727
    %v729 = vsub.f32 1.0, %v724
    %v730 = vmul.f32 %v729, %v728
    %v731 = vmul.f32 %v724, %v628
    %v732 = vadd.f32 %v730, %v731
    %v733 = vpack.c.bf16 %v732, %v732
    %734 = vmatprep.subr.bf16.mxu0 %v500
    %735 = vmatpush1.bf16.msra.mxu0 %v499
    %736 = vmatprep.subr.bf16.mxu0 %v497
    %737 = vmatpush1.bf16.msra.mxu0 %v496
    %738 = vmatprep.subr.bf16.mxu0 %v494
    %739 = vmatpush1.bf16.msra.mxu0 %v493
    %740 = vmatprep.subr.bf16.mxu0 %v491
    %741 = vmatpush1.bf16.msra.mxu0 %v490
    %742 = vmatprep.subr.bf16.mxu0 %v488
    %743 = vmatpush1.bf16.msra.mxu0 %v487
    %744 = vmatprep.subr.bf16.mxu0 %v485
    %745 = vmatpush1.bf16.msra.mxu0 %v484
    %746 = vmatprep.subr.bf16.mxu0 %v482
    %747 = vmatpush1.bf16.msra.mxu0 %v481
    %748 = vmatprep.subr.bf16.mxu0 %v479
    %749 = vmatpush1.bf16.msra.mxu0 %v478
    %750 = vmatprep.subr.bf16.mxu0 0
    %751 = vmatpush2.bf16.msra.mxu0 0
    %752 = vmatprep.subr.bf16.mxu0 0
    %753 = vmatpush2.bf16.msra.mxu0 0
    %754 = vmatprep.subr.bf16.mxu0 0
    %755 = vmatpush2.bf16.msra.mxu0 0
    %756 = vmatprep.subr.bf16.mxu0 0
    %757 = vmatpush2.bf16.msra.mxu0 0
    %758 = vmatprep.subr.bf16.mxu0 0
    %759 = vmatpush2.bf16.msra.mxu0 0
    %760 = vmatprep.subr.bf16.mxu0 0
    %761 = vmatpush2.bf16.msra.mxu0 0
    %762 = vmatprep.subr.bf16.mxu0 0
    %763 = vmatpush2.bf16.msra.mxu0 0
    %764 = vmatprep.subr.bf16.mxu0 0
    %765 = vmatpush2.bf16.msra.mxu0 0
    %766 = vmatprep.mubr.bf16.mxu0 0
    %767 = vmatmul.mubr.bf16.gmra.mxu0 %v733
    %v768 = vpop.f32.mrf.mxu0
    %v769 = vadd.f32 0.0, %v768
    %v770 = vpop.f32.mrf.mxu0
    %v771 = vadd.f32 0.0, %v770
    %v772 = vpop.f32.mrf.mxu0
    %v773 = vpop.f32.mrf.mxu0
    %774 = vdwg.mxu0
    %775 = vmatprep.subr.bf16.mxu0 0
    %776 = vmatpush1.bf16.msra.mxu0 %v501
    %777 = vmatprep.subr.bf16.mxu0 0
    %778 = vmatpush1.bf16.msra.mxu0 %v498
    %779 = vmatprep.subr.bf16.mxu0 0
    %780 = vmatpush1.bf16.msra.mxu0 %v495
    %781 = vmatprep.subr.bf16.mxu0 0
    %782 = vmatpush1.bf16.msra.mxu0 %v492
    %783 = vmatprep.subr.bf16.mxu0 0
    %784 = vmatpush1.bf16.msra.mxu0 %v489
    %785 = vmatprep.subr.bf16.mxu0 0
    %786 = vmatpush1.bf16.msra.mxu0 %v486
    %787 = vmatprep.subr.bf16.mxu0 0
    %788 = vmatpush1.bf16.msra.mxu0 %v483
    %789 = vmatprep.subr.bf16.mxu0 0
    %790 = vmatpush1.bf16.msra.mxu0 %v480
    %791 = vmatprep.subr.bf16.mxu0 0
    %792 = vmatpush2.bf16.msra.mxu0 0
    %793 = vmatprep.subr.bf16.mxu0 0
    %794 = vmatpush2.bf16.msra.mxu0 0
    %795 = vmatprep.subr.bf16.mxu0 0
    %796 = vmatpush2.bf16.msra.mxu0 0
    %797 = vmatprep.subr.bf16.mxu0 0
    %798 = vmatpush2.bf16.msra.mxu0 0
    %799 = vmatprep.subr.bf16.mxu0 0
    %800 = vmatpush2.bf16.msra.mxu0 0
    %801 = vmatprep.subr.bf16.mxu0 0
    %802 = vmatpush2.bf16.msra.mxu0 0
    %803 = vmatprep.subr.bf16.mxu0 0
    %804 = vmatpush2.bf16.msra.mxu0 0
    %805 = vmatprep.subr.bf16.mxu0 0
    %806 = vmatpush2.bf16.msra.mxu0 0
    %807 = vmatprep.mubr.bf16.mxu0 0
    %808 = vmatmul.mubr.bf16.gmra.mxu0 %v733
    %v809 = vpop.f32.mrf.mxu0
    %v810 = vadd.f32 0.0, %v809
    %v811 = vpop.f32.mrf.mxu0
    %v812 = vpop.f32.mrf.mxu0
    %v813 = vpop.f32.mrf.mxu0
    %814 = vdwg.mxu0
    %v815 = vadd.f32 %v303, %v769
    %v816 = vxor.u32 %v815, 2147483648
    %v817 = vmul.f32 %v816, 1.442695
    %v818 = vpow.pop %v817
    %v819 = vadd.f32 %v818, 1.0
    %v820 = vrcp.pop %v819
    %v821 = vmul.f32 1.0, %v820
    %v822 = vadd.f32 %v305, %v771
    %v823 = vxor.u32 %v822, 2147483648
    %v824 = vmul.f32 %v823, 1.442695
    %v825 = vpow.pop %v824
    %v826 = vadd.f32 %v825, 1.0
    %v827 = vrcp.pop %v826
    %v828 = vmul.f32 1.0, %v827
    %v829 = vadd.f32 %v810, %v394
    %v830 = vmul.f32 %v821, %v829
    %v831 = vadd.f32 %v352, %v830
    %v832 = vtanh.pop %v831
    %v833 = vsub.f32 1.0, %v828
    %v834 = vmul.f32 %v833, %v832
    %v835 = vmul.f32 %v828, %v732
    %v836 = vadd.f32 %v834, %v835
    %837 = vst [vmem:[%s9] sm:$0xff] %v836
    %v838 = vld [vmem:[#allocation6] sm:$0xf]
    %v839 = vld [vmem:[#allocation6 + $0x4] sm:$0xf]
    %v840 = vld [vmem:[#allocation6 + $0x8] sm:$0xf]
    %v841 = vld [vmem:[#allocation6 + $0xc] sm:$0xf]
    %v842 = vld [vmem:[#allocation6 + $0x10] sm:$0xf]
    %v843 = vld [vmem:[#allocation6 + $0x14] sm:$0xf]
    %v844 = vld [vmem:[#allocation6 + $0x18] sm:$0xf]
    %v845 = vld [vmem:[#allocation6 + $0x1c] sm:$0xf]
    %v846 = vld [vmem:[#allocation6 + $0x20] sm:$0xf]
    %v847 = vld [vmem:[#allocation6 + $0x24] sm:$0xf]
    %v848 = vld [vmem:[#allocation6 + $0x28] sm:$0xf]
    %v849 = vld [vmem:[#allocation6 + $0x2c] sm:$0xf]
    %v850 = vld [vmem:[#allocation6 + $0x30] sm:$0xf]
    %v851 = vld [vmem:[#allocation6 + $0x34] sm:$0xf]
    %v852 = vld [vmem:[#allocation6 + $0x38] sm:$0xf]
    %v853 = vld [vmem:[#allocation6 + $0x3c] sm:$0xf]
    %v854 = vld [vmem:[%s7] sm:$0x1]
    %v856 = vlaneseq
    %v857 = vshrl.u32 %v856, 7
    %v858 = vsub.s32 0, %v857
    %v859 = vrot.slane %v854, %v858
    %v877 = vunpack.c.l.b16 %v838
    %v878 = vunpack.c.l.b16 %v839
    %v879 = vunpack.c.l.b16 %v840
    %v880 = vunpack.c.l.b16 %v841
    %v881 = vunpack.c.l.b16 %v842
    %v882 = vunpack.c.l.b16 %v843
    %v883 = vunpack.c.l.b16 %v844
    %v884 = vunpack.c.l.b16 %v845
    %v885 = vunpack.c.l.b16 %v846
    %v886 = vunpack.c.l.b16 %v847
    %v887 = vunpack.c.l.b16 %v848
    %v888 = vunpack.c.l.b16 %v849
    %v889 = vunpack.c.l.b16 %v850
    %v890 = vunpack.c.l.b16 %v851
    %v891 = vunpack.c.l.b16 %v852
    %v892 = vunpack.c.l.b16 %v853
    %v893 = vpack.c.b16 %v878, %v877
    %v894 = vpack.c.b16 %v880, %v879
    %v895 = vpack.c.b16 %v882, %v881
    %v896 = vpack.c.b16 %v884, %v883
    %v897 = vpack.c.b16 %v886, %v885
    %v898 = vpack.c.b16 %v888, %v887
    %v899 = vpack.c.b16 %v890, %v889
    %v900 = vpack.c.b16 %v892, %v891
    %909 = vmatprep.subr.bf16.mxu0 0
    %910 = vmatpush1.bf16.msra.mxu0 %v900
    %911 = vmatprep.subr.bf16.mxu0 0
    %912 = vmatpush1.bf16.msra.mxu0 %v899
    %913 = vmatprep.subr.bf16.mxu0 0
    %914 = vmatpush1.bf16.msra.mxu0 %v898
    %915 = vmatprep.subr.bf16.mxu0 0
    %916 = vmatpush1.bf16.msra.mxu0 %v897
    %917 = vmatprep.subr.bf16.mxu0 0
    %918 = vmatpush1.bf16.msra.mxu0 %v896
    %919 = vmatprep.subr.bf16.mxu0 0
    %920 = vmatpush1.bf16.msra.mxu0 %v895
    %921 = vmatprep.subr.bf16.mxu0 0
    %922 = vmatpush1.bf16.msra.mxu0 %v894
    %923 = vmatprep.subr.bf16.mxu0 0
    %924 = vmatpush1.bf16.msra.mxu0 %v893
    %925 = vmatprep.subr.bf16.mxu0 0
    %926 = vmatpush2.bf16.msra.mxu0 0
    %927 = vmatprep.subr.bf16.mxu0 0
    %928 = vmatpush2.bf16.msra.mxu0 0
    %929 = vmatprep.subr.bf16.mxu0 0
    %930 = vmatpush2.bf16.msra.mxu0 0
    %931 = vmatprep.subr.bf16.mxu0 0
    %932 = vmatpush2.bf16.msra.mxu0 0
    %933 = vmatprep.subr.bf16.mxu0 0
    %934 = vmatpush2.bf16.msra.mxu0 0
    %935 = vmatprep.subr.bf16.mxu0 0
    %936 = vmatpush2.bf16.msra.mxu0 0
    %937 = vmatprep.subr.bf16.mxu0 0
    %938 = vmatpush2.bf16.msra.mxu0 0
    %939 = vmatprep.subr.bf16.mxu0 0
    %940 = vmatpush2.bf16.msra.mxu0 0
    %941 = vmatprep.mubr.bf16.mxu0 0
    %942 = vmatmul.mubr.bf16.gmra.mxu0 %v629
    %v943 = vpop.f32.mrf.mxu0
    %v944 = vadd.f32 %v859, %v943
    %v945 = vpop.f32.mrf.mxu0
    %v946 = vpop.f32.mrf.mxu0
    %v947 = vpop.f32.mrf.mxu0
    %948 = vdwg.mxu0
    %949 = vmax.xlane.f32.xlu0 %v944
    %v950 = vpop.xlane.xlu0 %949
    %v951 = vsub.f32 %v944, %v950
    %v952 = vmul.f32 %v951, 1.442695
    %v953 = vpow.pop %v952
    %954 = vadd.xlane.f32.xlu0 %v953
    %v955 = vpop.xlane.xlu0 %954
    %v956 = vlog2.pop %v955
    %v957 = vmul.f32 %v956, 0.6931472
    %v958 = vsub.f32 %v951, %v957
    %959 = vst [vmem:[%s8] sm:$0xff] %v958
    // Predicated region
    $region46: #{decoder_rnn_forward.1} parent=1 // pred_check
      _
    $region47: #{decoder_rnn_forward.1} parent=1 // pred_check_branch
      %961 = sbr.rel (0) target = $region49
    $region48: #{decoder_rnn_forward.1} parent=1 // pred_region
      _
    $region49: #{decoder_rnn_forward.1} parent=1 // pred_fallthru
      _
    // Predicated region
    $region50: #{decoder_rnn_forward.1} parent=1 // pred_check
      _
    $region51: #{decoder_rnn_forward.1} parent=1 // pred_check_branch
      %963 = sbr.rel (0) target = $region53
    $region52: #{decoder_rnn_forward.1} parent=1 // pred_region
      _
    $region53: #{decoder_rnn_forward.1} parent=1 // pred_fallthru
      _
    // Predicated region
    $region54: #{decoder_rnn_forward.1} parent=1 // pred_check
      _
    $region55: #{decoder_rnn_forward.1} parent=1 // pred_check_branch
      %965 = sbr.rel (0) target = $region57
    $region56: #{decoder_rnn_forward.1} parent=1 // pred_region
      _
    $region57: #{decoder_rnn_forward.1} parent=1 // pred_fallthru
      _
    // Predicated region
    $region58: #{decoder_rnn_forward.1} parent=1 // pred_check
      _
    $region59: #{decoder_rnn_forward.1} parent=1 // pred_check_branch
      %967 = sbr.rel (0) target = $region61
    $region60: #{decoder_rnn_forward.1} parent=1 // pred_region
      _
    $region61: #{decoder_rnn_forward.1} parent=1 // pred_fallthru
      _
    %968 = vsyncpa [#allocation3], 1
    %969 = vsyncpa [#allocation5], 1

</llo_original>
